<compile_context>
chip_gen: v7x
topology: tpu7x:2x2x1
jax: 0.10.0
libtpu: 0.0.40
codegen_flags: <defaults>
</compile_context>

<pallas_src>
import math

import jax
import jax.numpy as jnp
from jax.experimental import pallas as pl
from jax.experimental.pallas import tpu as pltpu

_LANE = 128                          # vreg lane width
_BLOCK_BYTES = 2 * 1024 * 1024       # per-block budget (v7x-safe with double buffering)
_VMEM_LIMIT_BYTES = 32 * 1024 * 1024 # explicit scoped-VMEM limit, fits v5e/v6e/v7x


def _flatten_copy_kernel(x_ref, o_ref):
    # Pure identity copy of one lane-dense tile of the already-flattened slab.
    o_ref[...] = x_ref[...]


def _sublane_align(itemsize: int) -> int:
    # Packed-sublane alignment: 8 rows for 4-byte, 16 for 2-byte, 32 for 1-byte dtypes.
    return max(8, 32 // max(1, itemsize))


def _pick_block(dim: int, align: int, max_elems: int) -> int:
    """Largest align-multiple <= min(dim, max_elems); prefers exact divisors of dim.

    Callers guarantee max_elems >= align, so the result never exceeds the byte
    budget (this fixes the old cap-floor overshoot). dim <= align returns the
    full dim (allowed: block dim equal to the array dim).
    """
    if dim <= align:
        return dim
    cap = (min(dim, max_elems) // align) * align
    cap = max(cap, align)  # defensive only; call sites keep max_elems >= align
    for d in range(cap, align - 1, -align):
        if dim % d == 0:
            return d       # exact divisor -> no masked edge block
    return cap             # non-divisor -> cdiv grid masks only the edge block


def flatten(x: jax.Array) -> jax.Array:
    """torch `x.view(x.size(0), -1)`: metadata-only reshape (zero HBM traffic).

    This is the recommended path — no copy can beat "no copy".
    """
    b = x.shape[0]
    flat = math.prod(x.shape[1:]) if x.ndim > 1 else 1
    return x.reshape(b, flat)


def flatten_pallas(x: jax.Array) -> jax.Array:
    """Materializing variant: tiled, software-pipelined identity copy."""
    b = x.shape[0]
    flat = math.prod(x.shape[1:]) if x.ndim > 1 else 1
    # Row-major reshape in the wrapper (metadata-only); the kernel only ever
    # sees a lane-dense (B, flat) slab, so there is no in-kernel relayout.
    x2 = x.reshape(b, flat)

    itemsize = jnp.dtype(x.dtype).itemsize
    sublane = _sublane_align(itemsize)
    row_bytes = max(1, flat * itemsize)

    if row_bytes * sublane <= _BLOCK_BYTES:
        # Whole contiguous rows per block -> fully contiguous HBM DMA descriptors.
        block_n = flat
        rows_cap = _BLOCK_BYTES // row_bytes              # >= sublane by branch condition
        block_b = _pick_block(b, sublane, rows_cap)
    else:
        # Rows too large for the budget: thin sublane-aligned row slab, split the
        # lane dim into 128-multiple blocks (only the edge block is masked).
        block_b = min(b, sublane)
        lanes_cap = _BLOCK_BYTES // (itemsize * block_b)  # >= 128 for all supported dtypes
        block_n = _pick_block(flat, _LANE, lanes_cap)

    grid = (pl.cdiv(b, block_b), pl.cdiv(flat, block_n))

    return pl.pallas_call(
        _flatten_copy_kernel,
        out_shape=jax.ShapeDtypeStruct((b, flat), x.dtype),
        grid=grid,
        in_specs=[pl.BlockSpec((block_b, block_n), lambda i, j: (i, j))],
        out_specs=pl.BlockSpec((block_b, block_n), lambda i, j: (i, j)),
        compiler_params=pltpu.CompilerParams(
            dimension_semantics=("parallel", "parallel"),
            vmem_limit_bytes=_VMEM_LIMIT_BYTES),
    )(x2)


if __name__ == "__main__":
    key = jax.random.PRNGKey(0)
    # NCHW input consistent with a conv feature map: batch=2, channels=4, 16x16 spatial.
    x = jax.random.normal(key, (2, 4, 16, 16), dtype=jnp.float32)

    ref = x.reshape(x.shape[0], -1)

    y_view = flatten(x)          # default path: metadata-only reshape (zero cost)
    y_copy = flatten_pallas(x)   # Pallas tiled-copy path (materializing)
    jax.block_until_ready((y_view, y_copy))

    assert y_view.shape == (2, 4 * 16 * 16), y_view.shape
    assert y_copy.shape == (2, 4 * 16 * 16), y_copy.shape
    assert y_view.dtype == x.dtype and y_copy.dtype == x.dtype
    assert jnp.array_equal(y_view, ref)
    assert jnp.array_equal(y_copy, ref)

    print("KERNEL_OK")
</pallas_src>

<mosaic_0001>
module attributes {stable_mosaic.version = 11 : i64} {
  func.func @_flatten_copy_kernel(%arg0: i32, %arg1: i32, %arg2: memref<2x1024xf32, #tpu.memory_space<vmem>>, %arg3: memref<2x1024xf32, #tpu.memory_space<vmem>>) attributes {dimension_semantics = [#tpu.dimension_semantics<parallel>, #tpu.dimension_semantics<parallel>], iteration_bounds = array<i64: 1, 1>, scalar_prefetch = 0 : i64, scratch_operands = 0 : i64, tpu.core_type = #tpu.core_type<tc>, window_params = [{transform_indices = @transform_0, window_bounds = array<i64: 2, 1024>}, {transform_indices = @transform_1, window_bounds = array<i64: 2, 1024>}]} {
    %c0 = arith.constant 0 : index
    %c0_0 = arith.constant 0 : index
    %0 = vector.load %arg2[%c0, %c0_0] : memref<2x1024xf32, #tpu.memory_space<vmem>>, vector<2x1024xf32>
    %c0_1 = arith.constant 0 : index
    %c0_2 = arith.constant 0 : index
    %1 = vector.load %arg3[%c0_1, %c0_2] : memref<2x1024xf32, #tpu.memory_space<vmem>>, vector<2x1024xf32>
    tpu.vector_store %arg3[%c0_1, %c0_2], %0 {strides = array<i32>} : memref<2x1024xf32, #tpu.memory_space<vmem>>, vector<2x1024xf32>,
    return
  }
  func.func @transform_0(%arg0: i32, %arg1: i32) -> (i32, i32) {
    %c0_i32 = arith.constant 0 : i32
    return %arg0, %arg1 : i32, i32
  }
  func.func @transform_1(%arg0: i32, %arg1: i32) -> (i32, i32) {
    %c0_i32 = arith.constant 0 : i32
    return %arg0, %arg1 : i32, i32
  }
}

</mosaic_0001>

<llo_original>
// kernel: tpu_custom_call.1
$region0: #{tpu_custom_call.1}
  #allocation0 [shape = 'u32[]', space=smem, size = 0x4, offset = 0x4, fixed_abs, tag = 'smem constant byte address 0x4 - core index']
  #allocation1 [shape = 'u32[144,128]{1,0:T(1,128)}', space=vmem, size = 0x12000, scoped, tag = 'internal scratch']
  %s0 = inlined_call_operand.hbm [shape: f32[2,1024], index: 0, kind: input, shape index: {}]
  %s1 = inlined_call_operand.hbm [shape: f32[2,1024], index: 1, kind: output, shape index: {}]
  %s2 = sld [smem:[#allocation0]]
  $region18: #{tpu_custom_call.1} parent=0
    _
  %s4 = ssub.s32 1, %s2
  %s5 = scalar_select 0, %s4, %s2
  $region1: #{tpu_custom_call.1} parent=0
    #allocation2 [shape = 'u8[8192]{0}', space=vmem, size = 0x2000, scoped, tag = 'input window, operand 0, single buffered']
    #allocation3 [shape = 's32[1]{0}', space=sflag, size = 0x4, scoped, tag = 'scoped memory for tpu_custom_call.1']
    #allocation4 [shape = 's32[1]{0}', space=sflag, size = 0x4, scoped, tag = 'scoped memory for tpu_custom_call.1']
    #allocation5 [shape = 'u8[8192]{0}', space=vmem, size = 0x2000, scoped, tag = 'output window, operand 0, single buffered']
    %6 = vsyncpa [#allocation3], 0
    %7 = vsyncpa [#allocation4], 0
    // Predicated region
    $region2: #{tpu_custom_call.1} parent=1 // pred_check
      _
    $region3: #{tpu_custom_call.1} parent=1 // pred_check_branch
      %9 = sbr.rel (0) target = $region5
    $region4: #{tpu_custom_call.1} parent=1 // pred_region
      %s11 = ssub.s32 256, 256
      %12 = vsyncadd [#allocation3], %s11
      %s14 = sshll.u32 [#allocation2], 4
      %s15 = int_to_ptr.vmem [resolvable:$true] %s14
      %17 = dma.hbm_to_vmem [thread:$0]  %s0, 256, %s15, [#allocation3]
    $region5: #{tpu_custom_call.1} parent=1 // pred_fallthru
      _
    // Predicated region
    $region6: #{tpu_custom_call.1} parent=1 // pred_check
      _
    $region7: #{tpu_custom_call.1} parent=1 // pred_check_branch
      %19 = sbr.rel (0) target = $region9
    $region8: #{tpu_custom_call.1} parent=1 // pred_region
      %20 = dma.done [#allocation3], 256
    $region9: #{tpu_custom_call.1} parent=1 // pred_fallthru
      _
    %v21 = vld [vmem:[#allocation2] sm:$0xff]
    %v22 = vld [vmem:[#allocation2 + $0x8] sm:$0xff]
    %23 = vst [vmem:[#allocation5] sm:$0xff] %v21
    %24 = vst [vmem:[#allocation5 + $0x8] sm:$0xff] %v22
    // Predicated region
    $region10: #{tpu_custom_call.1} parent=1 // pred_check
      _
    $region11: #{tpu_custom_call.1} parent=1 // pred_check_branch
      %26 = sbr.rel (0) target = $region13
    $region12: #{tpu_custom_call.1} parent=1 // pred_region
      %s28 = ssub.s32 256, 256
      %29 = vsyncadd [#allocation4], %s28
      %s31 = sshll.u32 [#allocation5], 4
      %s32 = int_to_ptr.vmem [resolvable:$true] %s31
      %34 = dma.vmem_to_hbm [thread:$0]  %s32, 256, %s1, [#allocation4]
    $region13: #{tpu_custom_call.1} parent=1 // pred_fallthru
      _
    // Predicated region
    $region14: #{tpu_custom_call.1} parent=1 // pred_check
      _
    $region15: #{tpu_custom_call.1} parent=1 // pred_check_branch
      %36 = sbr.rel (0) target = $region17
    $region16: #{tpu_custom_call.1} parent=1 // pred_region
      %37 = dma.done [#allocation4], 256
    $region17: #{tpu_custom_call.1} parent=1 // pred_fallthru
      _
    %38 = vsyncpa [#allocation3], 1
    %39 = vsyncpa [#allocation4], 1

</llo_original>
